<compile_context>
chip_gen: v5e
topology: v5e:2x2
jax: 0.10.0
libtpu: 0.0.40
codegen_flags: <defaults>
</compile_context>

<pallas_src>
import jax
import jax.numpy as jnp
from jax.experimental import pallas as pl
from jax.experimental.pallas import tpu as pltpu


HIDDEN = 128   # all hidden layers are 128-wide (matches 128x128 MXU tiles)
LANE = 128     # TPU lane width: pad feature dims to a multiple of this


def dqn_kernel(x_ref, w0_ref, b0_ref, wh_ref, bh_ref, w5_ref, b5_ref, o_ref):
    # Entire MLP hot path runs in VMEM: 6 MXU matmuls + VPU bias-add/ReLU.
    # Inputs/weights are bf16; accumulation is f32; output stored as f32.
    h = jnp.dot(x_ref[...], w0_ref[...],
                preferred_element_type=jnp.float32) + b0_ref[...]
    h = jnp.maximum(h, 0.0).astype(jnp.bfloat16)

    # Four identical hidden layers, weights packed into one array (static unroll).
    for i in range(4):
        y = jnp.dot(h, wh_ref[i],
                    preferred_element_type=jnp.float32) + bh_ref[i]
        h = jnp.maximum(y, 0.0).astype(jnp.bfloat16)

    # Output layer (zero-padded to 128 lane-dense columns), no ReLU.
    out = jnp.dot(h, w5_ref[...],
                  preferred_element_type=jnp.float32) + b5_ref[...]
    o_ref[...] = out.astype(o_ref.dtype)


def init_params(key, input_dim, output_dim):
    """Deterministic PyTorch-style (Kaiming-uniform-ish) init; W stored as (in, out)."""
    dims = [(input_dim, HIDDEN), (HIDDEN, HIDDEN), (HIDDEN, HIDDEN),
            (HIDDEN, HIDDEN), (HIDDEN, HIDDEN), (HIDDEN, output_dim)]
    params = []
    for (fan_in, fan_out) in dims:
        key, kw, kb = jax.random.split(key, 3)
        bound = 1.0 / jnp.sqrt(jnp.float32(fan_in))
        w = jax.random.uniform(kw, (fan_in, fan_out), jnp.float32, -bound, bound)
        b = jax.random.uniform(kb, (1, fan_out), jnp.float32, -bound, bound)
        params.append((w, b))
    return params


def pack_params(params, input_dim, output_dim):
    """Pad + pack f32 (in,out) params into bf16 kernel-ready arrays (done once)."""
    in_pad = pl.cdiv(input_dim, LANE) * LANE
    out_pad = pl.cdiv(output_dim, LANE) * LANE

    w0, b0 = params[0]
    w0p = jnp.zeros((in_pad, HIDDEN), jnp.bfloat16).at[:input_dim, :].set(
        w0.astype(jnp.bfloat16))
    b0p = b0.astype(jnp.float32)

    # Hidden layers 1..4: one (4,128,128) weight slab + one (4,1,128) bias slab.
    wh = jnp.stack([w.astype(jnp.bfloat16) for (w, _) in params[1:5]])
    bh = jnp.stack([b.astype(jnp.float32) for (_, b) in params[1:5]])

    w5, b5 = params[5]
    w5p = jnp.zeros((HIDDEN, out_pad), jnp.bfloat16).at[:, :output_dim].set(
        w5.astype(jnp.bfloat16))
    b5p = jnp.zeros((1, out_pad), jnp.float32).at[:, :output_dim].set(
        b5.astype(jnp.float32))

    return (w0p, b0p, wh, bh, w5p, b5p)


def dqn_forward(x, packed, input_dim, output_dim, *, block_b=128):
    """x: (B, input_dim) f32; packed: output of pack_params. Returns (B, output_dim) f32."""
    w0p, b0p, wh, bh, w5p, b5p = packed
    B = x.shape[0]
    in_pad = w0p.shape[0]
    out_pad = w5p.shape[1]

    # Batch tile: multiple of 8 (sublanes), capped at block_b; pad B up to it.
    tb = min(block_b, max(8, pl.cdiv(B, 8) * 8))
    bp = pl.cdiv(B, tb) * tb
    xp = jnp.zeros((bp, in_pad), jnp.bfloat16).at[:B, :input_dim].set(
        x.astype(jnp.bfloat16))

    grid = (bp // tb,)

    flops = 2 * bp * (in_pad * HIDDEN + 4 * HIDDEN * HIDDEN + HIDDEN * out_pad)
    bytes_accessed = (
        xp.size * 2                                   # x (bf16)
        + (w0p.size + wh.size + w5p.size) * 2         # weights (bf16)
        + (b0p.size + bh.size + b5p.size) * 4         # biases (f32)
        + bp * out_pad * 4                            # output (f32)
    )

    out = pl.pallas_call(
        dqn_kernel,
        out_shape=jax.ShapeDtypeStruct((bp, out_pad), jnp.float32),
        grid=grid,
        in_specs=[
            pl.BlockSpec((tb, in_pad), lambda i: (i, 0)),            # x tile
            pl.BlockSpec((in_pad, HIDDEN), lambda i: (0, 0)),        # W0 (resident)
            pl.BlockSpec((1, HIDDEN), lambda i: (0, 0)),             # b0
            pl.BlockSpec((4, HIDDEN, HIDDEN), lambda i: (0, 0, 0)),  # packed hidden W
            pl.BlockSpec((4, 1, HIDDEN), lambda i: (0, 0, 0)),       # packed hidden b
            pl.BlockSpec((HIDDEN, out_pad), lambda i: (0, 0)),       # W5 (padded)
            pl.BlockSpec((1, out_pad), lambda i: (0, 0)),            # b5 (padded)
        ],
        out_specs=pl.BlockSpec((tb, out_pad), lambda i: (i, 0)),
        compiler_params=pltpu.CompilerParams(
            dimension_semantics=("parallel",),
            vmem_limit_bytes=8 * 1024 * 1024,
        ),
        cost_estimate=pl.CostEstimate(
            flops=flops, transcendentals=0, bytes_accessed=bytes_accessed),
    )(xp, w0p, b0p, wh, bh, w5p, b5p)

    return out[:B, :output_dim]


def dqn_reference_bf16(x, params):
    """Pure-JAX reference matching the kernel numerics (bf16 operands, f32 accum)."""
    h = x.astype(jnp.bfloat16)
    n = len(params)
    for i, (w, b) in enumerate(params):
        y = jnp.dot(h, w.astype(jnp.bfloat16),
                    preferred_element_type=jnp.float32) + b
        if i < n - 1:
            h = jnp.maximum(y, 0.0).astype(jnp.bfloat16)
        else:
            y_out = y
    return y_out


if __name__ == "__main__":
    B = 8            # batch
    INPUT_DIM = 16   # state dimension
    OUTPUT_DIM = 4   # number of actions

    key = jax.random.PRNGKey(0)
    key, kx = jax.random.split(key)
    x = jax.random.normal(kx, (B, INPUT_DIM), dtype=jnp.float32)
    params = init_params(key, INPUT_DIM, OUTPUT_DIM)
    packed = pack_params(params, INPUT_DIM, OUTPUT_DIM)

    out = dqn_forward(x, packed, INPUT_DIM, OUTPUT_DIM)
    out = jax.block_until_ready(out)

    ref = dqn_reference_bf16(x, params)
    assert out.shape == (B, OUTPUT_DIM)
    assert jnp.allclose(out, ref, atol=1e-2, rtol=1e-2), "mismatch vs. JAX bf16 reference"

    print("KERNEL_OK")
</pallas_src>

<mosaic_0001>
module attributes {stable_mosaic.version = 11 : i64} {
  func.func @dqn_kernel(%arg0: i32, %arg1: memref<8x128xbf16, #tpu.memory_space<vmem>>, %arg2: memref<128x128xbf16, #tpu.memory_space<vmem>>, %arg3: memref<1x128xf32, #tpu.memory_space<vmem>>, %arg4: memref<4x128x128xbf16, #tpu.memory_space<vmem>>, %arg5: memref<4x1x128xf32, #tpu.memory_space<vmem>>, %arg6: memref<128x128xbf16, #tpu.memory_space<vmem>>, %arg7: memref<1x128xf32, #tpu.memory_space<vmem>>, %arg8: memref<8x128xf32, #tpu.memory_space<vmem>>) attributes {dimension_semantics = [#tpu.dimension_semantics<parallel>], iteration_bounds = array<i64: 1>, scalar_prefetch = 0 : i64, scratch_operands = 0 : i64, tpu.core_type = #tpu.core_type<tc>, window_params = [{transform_indices = @transform_0, window_bounds = array<i64: 8, 128>}, {pipeline_mode = #tpu.pipeline_mode<synchronous>, transform_indices = @transform_1, window_bounds = array<i64: 128, 128>}, {pipeline_mode = #tpu.pipeline_mode<synchronous>, transform_indices = @transform_2, window_bounds = array<i64: 1, 128>}, {pipeline_mode = #tpu.pipeline_mode<synchronous>, transform_indices = @transform_3, window_bounds = array<i64: 4, 128, 128>}, {pipeline_mode = #tpu.pipeline_mode<synchronous>, transform_indices = @transform_4, window_bounds = array<i64: 4, 1, 128>}, {pipeline_mode = #tpu.pipeline_mode<synchronous>, transform_indices = @transform_5, window_bounds = array<i64: 128, 128>}, {pipeline_mode = #tpu.pipeline_mode<synchronous>, transform_indices = @transform_6, window_bounds = array<i64: 1, 128>}, {transform_indices = @transform_7, window_bounds = array<i64: 8, 128>}]} {
    %c0 = arith.constant 0 : index
    %c0_0 = arith.constant 0 : index
    %0 = vector.load %arg1[%c0, %c0_0] : memref<8x128xbf16, #tpu.memory_space<vmem>>, vector<8x128xbf16>
    %c0_1 = arith.constant 0 : index
    %c0_2 = arith.constant 0 : index
    %1 = vector.load %arg2[%c0_1, %c0_2] : memref<128x128xbf16, #tpu.memory_space<vmem>>, vector<128x128xbf16>
    %cst = arith.constant dense<0.000000e+00> : vector<8x128xf32>
    %2 = tpu.matmul %0, %1, %cst {dimension_numbers = #tpu.dot_dimension_numbers<[1], [0], [0], [1], [0, 0, 1, 1], [], []>} : vector<8x128xbf16>, vector<128x128xbf16>, vector<8x128xf32> -> vector<8x128xf32>
    %c0_3 = arith.constant 0 : index
    %c0_4 = arith.constant 0 : index
    %3 = vector.load %arg3[%c0_3, %c0_4] : memref<1x128xf32, #tpu.memory_space<vmem>>, vector<1x128xf32>
    %4 = vector.broadcast %3 : vector<1x128xf32> to vector<8x128xf32>
    %5 = arith.addf %2, %4 : vector<8x128xf32>
    %cst_5 = arith.constant 0.000000e+00 : f32
    %6 = vector.broadcast %cst_5 : f32 to vector<8x128xf32>
    %7 = arith.maximumf %5, %6 : vector<8x128xf32>
    %8 = arith.truncf %7 : vector<8x128xf32> to vector<8x128xbf16>
    %c0_6 = arith.constant 0 : index
    %c0_7 = arith.constant 0 : index
    %c0_8 = arith.constant 0 : index
    %9 = vector.load %arg4[%c0_6, %c0_7, %c0_8] : memref<4x128x128xbf16, #tpu.memory_space<vmem>>, vector<1x128x128xbf16>
    %10 = vector.shape_cast %9 : vector<1x128x128xbf16> to vector<128x128xbf16>
    %cst_9 = arith.constant dense<0.000000e+00> : vector<8x128xf32>
    %11 = tpu.matmul %8, %10, %cst_9 {dimension_numbers = #tpu.dot_dimension_numbers<[1], [0], [0], [1], [0, 0, 1, 1], [], []>} : vector<8x128xbf16>, vector<128x128xbf16>, vector<8x128xf32> -> vector<8x128xf32>
    %c0_10 = arith.constant 0 : index
    %c0_11 = arith.constant 0 : index
    %c0_12 = arith.constant 0 : index
    %12 = vector.load %arg5[%c0_10, %c0_11, %c0_12] : memref<4x1x128xf32, #tpu.memory_space<vmem>>, vector<1x1x128xf32>
    %13 = vector.shape_cast %12 : vector<1x1x128xf32> to vector<1x128xf32>
    %14 = vector.broadcast %13 : vector<1x128xf32> to vector<8x128xf32>
    %15 = arith.addf %11, %14 : vector<8x128xf32>
    %cst_13 = arith.constant 0.000000e+00 : f32
    %16 = vector.broadcast %cst_13 : f32 to vector<8x128xf32>
    %17 = arith.maximumf %15, %16 : vector<8x128xf32>
    %18 = arith.truncf %17 : vector<8x128xf32> to vector<8x128xbf16>
    %c1 = arith.constant 1 : index
    %c0_14 = arith.constant 0 : index
    %c0_15 = arith.constant 0 : index
    %19 = vector.load %arg4[%c1, %c0_14, %c0_15] : memref<4x128x128xbf16, #tpu.memory_space<vmem>>, vector<1x128x128xbf16>
    %20 = vector.shape_cast %19 : vector<1x128x128xbf16> to vector<128x128xbf16>
    %cst_16 = arith.constant dense<0.000000e+00> : vector<8x128xf32>
    %21 = tpu.matmul %18, %20, %cst_16 {dimension_numbers = #tpu.dot_dimension_numbers<[1], [0], [0], [1], [0, 0, 1, 1], [], []>} : vector<8x128xbf16>, vector<128x128xbf16>, vector<8x128xf32> -> vector<8x128xf32>
    %c1_17 = arith.constant 1 : index
    %c0_18 = arith.constant 0 : index
    %c0_19 = arith.constant 0 : index
    %22 = vector.load %arg5[%c1_17, %c0_18, %c0_19] : memref<4x1x128xf32, #tpu.memory_space<vmem>>, vector<1x1x128xf32>
    %23 = vector.shape_cast %22 : vector<1x1x128xf32> to vector<1x128xf32>
    %24 = vector.broadcast %23 : vector<1x128xf32> to vector<8x128xf32>
    %25 = arith.addf %21, %24 : vector<8x128xf32>
    %cst_20 = arith.constant 0.000000e+00 : f32
    %26 = vector.broadcast %cst_20 : f32 to vector<8x128xf32>
    %27 = arith.maximumf %25, %26 : vector<8x128xf32>
    %28 = arith.truncf %27 : vector<8x128xf32> to vector<8x128xbf16>
    %c2 = arith.constant 2 : index
    %c0_21 = arith.constant 0 : index
    %c0_22 = arith.constant 0 : index
    %29 = vector.load %arg4[%c2, %c0_21, %c0_22] : memref<4x128x128xbf16, #tpu.memory_space<vmem>>, vector<1x128x128xbf16>
    %30 = vector.shape_cast %29 : vector<1x128x128xbf16> to vector<128x128xbf16>
    %cst_23 = arith.constant dense<0.000000e+00> : vector<8x128xf32>
    %31 = tpu.matmul %28, %30, %cst_23 {dimension_numbers = #tpu.dot_dimension_numbers<[1], [0], [0], [1], [0, 0, 1, 1], [], []>} : vector<8x128xbf16>, vector<128x128xbf16>, vector<8x128xf32> -> vector<8x128xf32>
    %c2_24 = arith.constant 2 : index
    %c0_25 = arith.constant 0 : index
    %c0_26 = arith.constant 0 : index
    %32 = vector.load %arg5[%c2_24, %c0_25, %c0_26] : memref<4x1x128xf32, #tpu.memory_space<vmem>>, vector<1x1x128xf32>
    %33 = vector.shape_cast %32 : vector<1x1x128xf32> to vector<1x128xf32>
    %34 = vector.broadcast %33 : vector<1x128xf32> to vector<8x128xf32>
    %35 = arith.addf %31, %34 : vector<8x128xf32>
    %cst_27 = arith.constant 0.000000e+00 : f32
    %36 = vector.broadcast %cst_27 : f32 to vector<8x128xf32>
    %37 = arith.maximumf %35, %36 : vector<8x128xf32>
    %38 = arith.truncf %37 : vector<8x128xf32> to vector<8x128xbf16>
    %c3 = arith.constant 3 : index
    %c0_28 = arith.constant 0 : index
    %c0_29 = arith.constant 0 : index
    %39 = vector.load %arg4[%c3, %c0_28, %c0_29] : memref<4x128x128xbf16, #tpu.memory_space<vmem>>, vector<1x128x128xbf16>
    %40 = vector.shape_cast %39 : vector<1x128x128xbf16> to vector<128x128xbf16>
    %cst_30 = arith.constant dense<0.000000e+00> : vector<8x128xf32>
    %41 = tpu.matmul %38, %40, %cst_30 {dimension_numbers = #tpu.dot_dimension_numbers<[1], [0], [0], [1], [0, 0, 1, 1], [], []>} : vector<8x128xbf16>, vector<128x128xbf16>, vector<8x128xf32> -> vector<8x128xf32>
    %c3_31 = arith.constant 3 : index
    %c0_32 = arith.constant 0 : index
    %c0_33 = arith.constant 0 : index
    %42 = vector.load %arg5[%c3_31, %c0_32, %c0_33] : memref<4x1x128xf32, #tpu.memory_space<vmem>>, vector<1x1x128xf32>
    %43 = vector.shape_cast %42 : vector<1x1x128xf32> to vector<1x128xf32>
    %44 = vector.broadcast %43 : vector<1x128xf32> to vector<8x128xf32>
    %45 = arith.addf %41, %44 : vector<8x128xf32>
    %cst_34 = arith.constant 0.000000e+00 : f32
    %46 = vector.broadcast %cst_34 : f32 to vector<8x128xf32>
    %47 = arith.maximumf %45, %46 : vector<8x128xf32>
    %48 = arith.truncf %47 : vector<8x128xf32> to vector<8x128xbf16>
    %c0_35 = arith.constant 0 : index
    %c0_36 = arith.constant 0 : index
    %49 = vector.load %arg6[%c0_35, %c0_36] : memref<128x128xbf16, #tpu.memory_space<vmem>>, vector<128x128xbf16>
    %cst_37 = arith.constant dense<0.000000e+00> : vector<8x128xf32>
    %50 = tpu.matmul %48, %49, %cst_37 {dimension_numbers = #tpu.dot_dimension_numbers<[1], [0], [0], [1], [0, 0, 1, 1], [], []>} : vector<8x128xbf16>, vector<128x128xbf16>, vector<8x128xf32> -> vector<8x128xf32>
    %c0_38 = arith.constant 0 : index
    %c0_39 = arith.constant 0 : index
    %51 = vector.load %arg7[%c0_38, %c0_39] : memref<1x128xf32, #tpu.memory_space<vmem>>, vector<1x128xf32>
    %52 = vector.broadcast %51 : vector<1x128xf32> to vector<8x128xf32>
    %53 = arith.addf %50, %52 : vector<8x128xf32>
    %c0_40 = arith.constant 0 : index
    %c0_41 = arith.constant 0 : index
    %54 = vector.load %arg8[%c0_40, %c0_41] : memref<8x128xf32, #tpu.memory_space<vmem>>, vector<8x128xf32>
    tpu.vector_store %arg8[%c0_40, %c0_41], %53 {strides = array<i32>} : memref<8x128xf32, #tpu.memory_space<vmem>>, vector<8x128xf32>,
    return
  }
  func.func @transform_0(%arg0: i32) -> (i32, i32) {
    %c0_i32 = arith.constant 0 : i32
    %c0_i32_0 = arith.constant 0 : i32
    return %arg0, %c0_i32 : i32, i32
  }
  func.func @transform_1(%arg0: i32) -> (i32, i32) {
    %c0_i32 = arith.constant 0 : i32
    %c0_i32_0 = arith.constant 0 : i32
    %c0_i32_1 = arith.constant 0 : i32
    return %c0_i32, %c0_i32_0 : i32, i32
  }
  func.func @transform_2(%arg0: i32) -> (i32, i32) {
    %c0_i32 = arith.constant 0 : i32
    %c0_i32_0 = arith.constant 0 : i32
    %c0_i32_1 = arith.constant 0 : i32
    return %c0_i32, %c0_i32_0 : i32, i32
  }
  func.func @transform_3(%arg0: i32) -> (i32, i32, i32) {
    %c0_i32 = arith.constant 0 : i32
    %c0_i32_0 = arith.constant 0 : i32
    %c0_i32_1 = arith.constant 0 : i32
    %c0_i32_2 = arith.constant 0 : i32
    return %c0_i32, %c0_i32_0, %c0_i32_1 : i32, i32, i32
  }
  func.func @transform_4(%arg0: i32) -> (i32, i32, i32) {
    %c0_i32 = arith.constant 0 : i32
    %c0_i32_0 = arith.constant 0 : i32
    %c0_i32_1 = arith.constant 0 : i32
    %c0_i32_2 = arith.constant 0 : i32
    return %c0_i32, %c0_i32_0, %c0_i32_1 : i32, i32, i32
  }
  func.func @transform_5(%arg0: i32) -> (i32, i32) {
    %c0_i32 = arith.constant 0 : i32
    %c0_i32_0 = arith.constant 0 : i32
    %c0_i32_1 = arith.constant 0 : i32
    return %c0_i32, %c0_i32_0 : i32, i32
  }
  func.func @transform_6(%arg0: i32) -> (i32, i32) {
    %c0_i32 = arith.constant 0 : i32
    %c0_i32_0 = arith.constant 0 : i32
    %c0_i32_1 = arith.constant 0 : i32
    return %c0_i32, %c0_i32_0 : i32, i32
  }
  func.func @transform_7(%arg0: i32) -> (i32, i32) {
    %c0_i32 = arith.constant 0 : i32
    %c0_i32_0 = arith.constant 0 : i32
    return %arg0, %c0_i32 : i32, i32
  }
}

</mosaic_0001>

<llo_original>
// kernel: tpu_custom_call.1
$region0: #{tpu_custom_call.1}
  #allocation0 [shape = 'u32[]', space=smem, size = 0x4, offset = 0x4, fixed_abs, tag = 'smem constant byte address 0x4 - core index']
  #allocation1 [shape = 'u32[72,128]{1,0:T(1,128)}', space=vmem, size = 0x9000, scoped, tag = 'internal scratch']
  %s0 = inlined_call_operand.hbm [shape: bf16[8,128], index: 0, kind: input, shape index: {}]
  %s1 = inlined_call_operand.hbm [shape: bf16[128,128], index: 1, kind: input, shape index: {}]
  %s2 = inlined_call_operand.vmem [shape: f32[1,128], index: 2, kind: input, shape index: {}]
  %s3 = inlined_call_operand.hbm [shape: bf16[4,128,128], index: 3, kind: input, shape index: {}]
  %s4 = inlined_call_operand.hbm [shape: f32[4,1,128], index: 4, kind: input, shape index: {}]
  %s5 = inlined_call_operand.hbm [shape: bf16[128,128], index: 5, kind: input, shape index: {}]
  %s6 = inlined_call_operand.vmem [shape: f32[1,128], index: 6, kind: input, shape index: {}]
  %s7 = inlined_call_operand.hbm [shape: f32[8,128], index: 7, kind: output, shape index: {}]
  %s8 = sld [smem:[#allocation0]]
  $region58: #{tpu_custom_call.1} parent=0
    _
  %s10 = ssub.s32 1, %s8
  %s11 = scalar_select 0, %s10, %s8
  $region1: #{tpu_custom_call.1} parent=0
    #allocation2 [shape = 'u8[2048]{0}', space=vmem, size = 0x800, scoped, tag = 'input window, operand 0, single buffered']
    #allocation3 [shape = 's32[1]{0}', space=sflag, size = 0x4, scoped, tag = 'scoped memory for tpu_custom_call.1']
    #allocation4 [shape = 's32[1]{0}', space=sflag, size = 0x4, scoped, tag = 'scoped memory for tpu_custom_call.1']
    #allocation5 [shape = 'u8[32768]{0}', space=vmem, size = 0x8000, scoped, tag = 'input window, operand 1, single buffered']
    #allocation6 [shape = 's32[1]{0}', space=sflag, size = 0x4, scoped, tag = 'scoped memory for tpu_custom_call.1']
    #allocation7 [shape = 'u8[131072]{0}', space=vmem, size = 0x20000, scoped, tag = 'input window, operand 3, single buffered']
    #allocation8 [shape = 'u8[2048]{0}', space=vmem, size = 0x800, scoped, tag = 'input window, operand 4, single buffered']
    #allocation9 [shape = 's32[1]{0}', space=sflag, size = 0x4, scoped, tag = 'scoped memory for tpu_custom_call.1']
    #allocation10 [shape = 'u8[32768]{0}', space=vmem, size = 0x8000, scoped, tag = 'input window, operand 5, single buffered']
    #allocation11 [shape = 'u8[4096]{0}', space=vmem, size = 0x1000, scoped, tag = 'output window, operand 0, single buffered']
    %12 = vsyncpa [#allocation3], 0
    %13 = vsyncpa [#allocation6], 0
    %14 = vsyncpa [#allocation9], 0
    %15 = vsyncpa [#allocation4], 0
    // Predicated region
    $region2: #{tpu_custom_call.1} parent=1 // pred_check
      _
    $region3: #{tpu_custom_call.1} parent=1 // pred_check_branch
      %17 = sbr.rel (0) target = $region5
    $region4: #{tpu_custom_call.1} parent=1 // pred_region
      %19 = vsyncadd [#allocation3], 0
      %s21 = sshll.u32 %s0, 4
      %s22 = int_to_ptr.hbm [resolvable:$true] %s21
      %s23 = sshll.u32 [#allocation2], 4
      %s24 = int_to_ptr.vmem [resolvable:$true] %s23
      %26 = dma.hbm_to_vmem [thread:$0]  %s22, 64, %s24, [#allocation3]
    $region5: #{tpu_custom_call.1} parent=1 // pred_fallthru
      _
    // Predicated region
    $region6: #{tpu_custom_call.1} parent=1 // pred_check
      _
    $region7: #{tpu_custom_call.1} parent=1 // pred_check_branch
      %28 = sbr.rel (0) target = $region9
    $region8: #{tpu_custom_call.1} parent=1 // pred_region
      %30 = vsyncadd [#allocation6], 0
      %s31 = sshll.u32 %s1, 4
      %s32 = int_to_ptr.hbm [resolvable:$true] %s31
      %s33 = sshll.u32 [#allocation5], 4
      %s34 = int_to_ptr.vmem [resolvable:$true] %s33
      %39 = dma.hbm_to_vmem [thread:$0]  %s32, 1024, %s34, [#allocation6], 64, 64, 4
    $region9: #{tpu_custom_call.1} parent=1 // pred_fallthru
      _
    // Predicated region
    $region10: #{tpu_custom_call.1} parent=1 // pred_check
      _
    $region11: #{tpu_custom_call.1} parent=1 // pred_check_branch
      %41 = sbr.rel (0) target = $region13
    $region12: #{tpu_custom_call.1} parent=1 // pred_region
      _
    $region13: #{tpu_custom_call.1} parent=1 // pred_fallthru
      _
    // Predicated region
    $region14: #{tpu_custom_call.1} parent=1 // pred_check
      _
    $region15: #{tpu_custom_call.1} parent=1 // pred_check_branch
      %43 = sbr.rel (0) target = $region17
    $region16: #{tpu_custom_call.1} parent=1 // pred_region
      %45 = vsyncadd [#allocation6], 0
      %s46 = sshll.u32 %s3, 4
      %s47 = int_to_ptr.hbm [resolvable:$true] %s46
      %s48 = sshll.u32 [#allocation7], 4
      %s49 = int_to_ptr.vmem [resolvable:$true] %s48
      %54 = dma.hbm_to_vmem [thread:$0]  %s47, 4096, %s49, [#allocation6], 64, 64, 4
    $region17: #{tpu_custom_call.1} parent=1 // pred_fallthru
      _
    // Predicated region
    $region18: #{tpu_custom_call.1} parent=1 // pred_check
      _
    $region19: #{tpu_custom_call.1} parent=1 // pred_check_branch
      %56 = sbr.rel (0) target = $region21
    $region20: #{tpu_custom_call.1} parent=1 // pred_region
      %58 = vsyncadd [#allocation9], 0
      %s59 = sshll.u32 %s4, 4
      %s60 = int_to_ptr.hbm [resolvable:$true] %s59
      %s61 = sshll.u32 [#allocation8], 4
      %s62 = int_to_ptr.vmem [resolvable:$true] %s61
      %67 = dma.hbm_to_vmem [thread:$0]  %s60, 64, %s62, [#allocation9], 16, 16, 1
    $region21: #{tpu_custom_call.1} parent=1 // pred_fallthru
      _
    // Predicated region
    $region22: #{tpu_custom_call.1} parent=1 // pred_check
      _
    $region23: #{tpu_custom_call.1} parent=1 // pred_check_branch
      %69 = sbr.rel (0) target = $region25
    $region24: #{tpu_custom_call.1} parent=1 // pred_region
      %71 = vsyncadd [#allocation9], 0
      %s72 = sshll.u32 %s5, 4
      %s73 = int_to_ptr.hbm [resolvable:$true] %s72
      %s74 = sshll.u32 [#allocation10], 4
      %s75 = int_to_ptr.vmem [resolvable:$true] %s74
      %80 = dma.hbm_to_vmem [thread:$0]  %s73, 1024, %s75, [#allocation9], 64, 64, 4
    $region25: #{tpu_custom_call.1} parent=1 // pred_fallthru
      _
    // Predicated region
    $region26: #{tpu_custom_call.1} parent=1 // pred_check
      _
    $region27: #{tpu_custom_call.1} parent=1 // pred_check_branch
      %82 = sbr.rel (0) target = $region29
    $region28: #{tpu_custom_call.1} parent=1 // pred_region
      _
    $region29: #{tpu_custom_call.1} parent=1 // pred_fallthru
      _
    // Predicated region
    $region30: #{tpu_custom_call.1} parent=1 // pred_check
      _
    $region31: #{tpu_custom_call.1} parent=1 // pred_check_branch
      %84 = sbr.rel (0) target = $region33
    $region32: #{tpu_custom_call.1} parent=1 // pred_region
      %86 = dma.done [#allocation3], 64
    $region33: #{tpu_custom_call.1} parent=1 // pred_fallthru
      _
    // Predicated region
    $region34: #{tpu_custom_call.1} parent=1 // pred_check
      _
    $region35: #{tpu_custom_call.1} parent=1 // pred_check_branch
      %88 = sbr.rel (0) target = $region37
    $region36: #{tpu_custom_call.1} parent=1 // pred_region
      %90 = dma.done [#allocation6], 1024
    $region37: #{tpu_custom_call.1} parent=1 // pred_fallthru
      _
    // Predicated region
    $region38: #{tpu_custom_call.1} parent=1 // pred_check
      _
    $region39: #{tpu_custom_call.1} parent=1 // pred_check_branch
      %92 = sbr.rel (0) target = $region41
    $region40: #{tpu_custom_call.1} parent=1 // pred_region
      %94 = dma.done [#allocation6], 4096
    $region41: #{tpu_custom_call.1} parent=1 // pred_fallthru
      _
    // Predicated region
    $region42: #{tpu_custom_call.1} parent=1 // pred_check
      _
    $region43: #{tpu_custom_call.1} parent=1 // pred_check_branch
      %96 = sbr.rel (0) target = $region45
    $region44: #{tpu_custom_call.1} parent=1 // pred_region
      %98 = dma.done [#allocation9], 64
    $region45: #{tpu_custom_call.1} parent=1 // pred_fallthru
      _
    // Predicated region
    $region46: #{tpu_custom_call.1} parent=1 // pred_check
      _
    $region47: #{tpu_custom_call.1} parent=1 // pred_check_branch
      %100 = sbr.rel (0) target = $region49
    $region48: #{tpu_custom_call.1} parent=1 // pred_region
      %102 = dma.done [#allocation9], 1024
    $region49: #{tpu_custom_call.1} parent=1 // pred_fallthru
      _
    %v103 = vld [vmem:[#allocation2] sm:$0xf]
    %v104 = vld [vmem:[#allocation5] sm:$0xf]
    %v105 = vld [vmem:[#allocation5 + $0x4] sm:$0xf]
    %v106 = vld [vmem:[#allocation5 + $0x8] sm:$0xf]
    %v107 = vld [vmem:[#allocation5 + $0xc] sm:$0xf]
    %v108 = vld [vmem:[#allocation5 + $0x10] sm:$0xf]
    %v109 = vld [vmem:[#allocation5 + $0x14] sm:$0xf]
    %v110 = vld [vmem:[#allocation5 + $0x18] sm:$0xf]
    %v111 = vld [vmem:[#allocation5 + $0x1c] sm:$0xf]
    %v112 = vld [vmem:[#allocation5 + $0x20] sm:$0xf]
    %v113 = vld [vmem:[#allocation5 + $0x24] sm:$0xf]
    %v114 = vld [vmem:[#allocation5 + $0x28] sm:$0xf]
    %v115 = vld [vmem:[#allocation5 + $0x2c] sm:$0xf]
    %v116 = vld [vmem:[#allocation5 + $0x30] sm:$0xf]
    %v117 = vld [vmem:[#allocation5 + $0x34] sm:$0xf]
    %v118 = vld [vmem:[#allocation5 + $0x38] sm:$0xf]
    %v119 = vld [vmem:[#allocation5 + $0x3c] sm:$0xf]
    %v120 = vld [vmem:[%s2] sm:$0x1]
    %v122 = vperm.slane %v120, 0
    %v140 = vunpack.c.l.b16 %v104
    %v141 = vunpack.c.l.b16 %v105
    %v142 = vunpack.c.l.b16 %v106
    %v143 = vunpack.c.l.b16 %v107
    %v144 = vunpack.c.l.b16 %v108
    %v145 = vunpack.c.l.b16 %v109
    %v146 = vunpack.c.l.b16 %v110
    %v147 = vunpack.c.l.b16 %v111
    %v148 = vunpack.c.l.b16 %v112
    %v149 = vunpack.c.l.b16 %v113
    %v150 = vunpack.c.l.b16 %v114
    %v151 = vunpack.c.l.b16 %v115
    %v152 = vunpack.c.l.b16 %v116
    %v153 = vunpack.c.l.b16 %v117
    %v154 = vunpack.c.l.b16 %v118
    %v155 = vunpack.c.l.b16 %v119
    %v156 = vpack.c.b16 %v141, %v140
    %v157 = vpack.c.b16 %v143, %v142
    %v158 = vpack.c.b16 %v145, %v144
    %v159 = vpack.c.b16 %v147, %v146
    %v160 = vpack.c.b16 %v149, %v148
    %v161 = vpack.c.b16 %v151, %v150
    %v162 = vpack.c.b16 %v153, %v152
    %v163 = vpack.c.b16 %v155, %v154
    %172 = vmatpush.bf16.msra.mxu0 %v163
    %173 = vmatpush.bf16.msra.mxu0 %v162
    %174 = vmatpush.bf16.msra.mxu0 %v161
    %175 = vmatpush.bf16.msra.mxu0 %v160
    %176 = vmatpush.bf16.msra.mxu0 %v159
    %177 = vmatpush.bf16.msra.mxu0 %v158
    %178 = vmatpush.bf16.msra.mxu0 %v157
    %179 = vmatpush.bf16.msra.mxu0 %v156
    %180 = vmatmul.bf16.gmra.mxu0 %v103
    %v181 = vpop.f32.mrf.mxu0
    %v182 = vadd.f32 %v122, %v181
    %v183 = vpop.f32.mrf.mxu0
    %184 = vdwg.mxu0
    %v185 = vmax.f32 %v182, 0.0
    %v186 = vpack.c.bf16 %v185, %v185
    %v187 = vld [vmem:[#allocation7] sm:$0xf]
    %v188 = vld [vmem:[#allocation7 + $0x4] sm:$0xf]
    %v189 = vld [vmem:[#allocation7 + $0x8] sm:$0xf]
    %v190 = vld [vmem:[#allocation7 + $0xc] sm:$0xf]
    %v191 = vld [vmem:[#allocation7 + $0x10] sm:$0xf]
    %v192 = vld [vmem:[#allocation7 + $0x14] sm:$0xf]
    %v193 = vld [vmem:[#allocation7 + $0x18] sm:$0xf]
    %v194 = vld [vmem:[#allocation7 + $0x1c] sm:$0xf]
    %v195 = vld [vmem:[#allocation7 + $0x20] sm:$0xf]
    %v196 = vld [vmem:[#allocation7 + $0x24] sm:$0xf]
    %v197 = vld [vmem:[#allocation7 + $0x28] sm:$0xf]
    %v198 = vld [vmem:[#allocation7 + $0x2c] sm:$0xf]
    %v199 = vld [vmem:[#allocation7 + $0x30] sm:$0xf]
    %v200 = vld [vmem:[#allocation7 + $0x34] sm:$0xf]
    %v201 = vld [vmem:[#allocation7 + $0x38] sm:$0xf]
    %v202 = vld [vmem:[#allocation7 + $0x3c] sm:$0xf]
    %v203 = vld [vmem:[#allocation8] sm:$0x1]
    %v205 = vperm.slane %v203, 0
    %v223 = vunpack.c.l.b16 %v187
    %v224 = vunpack.c.l.b16 %v188
    %v225 = vunpack.c.l.b16 %v189
    %v226 = vunpack.c.l.b16 %v190
    %v227 = vunpack.c.l.b16 %v191
    %v228 = vunpack.c.l.b16 %v192
    %v229 = vunpack.c.l.b16 %v193
    %v230 = vunpack.c.l.b16 %v194
    %v231 = vunpack.c.l.b16 %v195
    %v232 = vunpack.c.l.b16 %v196
    %v233 = vunpack.c.l.b16 %v197
    %v234 = vunpack.c.l.b16 %v198
    %v235 = vunpack.c.l.b16 %v199
    %v236 = vunpack.c.l.b16 %v200
    %v237 = vunpack.c.l.b16 %v201
    %v238 = vunpack.c.l.b16 %v202
    %v239 = vpack.c.b16 %v224, %v223
    %v240 = vpack.c.b16 %v226, %v225
    %v241 = vpack.c.b16 %v228, %v227
    %v242 = vpack.c.b16 %v230, %v229
    %v243 = vpack.c.b16 %v232, %v231
    %v244 = vpack.c.b16 %v234, %v233
    %v245 = vpack.c.b16 %v236, %v235
    %v246 = vpack.c.b16 %v238, %v237
    %255 = vmatpush.bf16.msra.mxu0 %v246
    %256 = vmatpush.bf16.msra.mxu0 %v245
    %257 = vmatpush.bf16.msra.mxu0 %v244
    %258 = vmatpush.bf16.msra.mxu0 %v243
    %259 = vmatpush.bf16.msra.mxu0 %v242
    %260 = vmatpush.bf16.msra.mxu0 %v241
    %261 = vmatpush.bf16.msra.mxu0 %v240
    %262 = vmatpush.bf16.msra.mxu0 %v239
    %263 = vmatmul.bf16.gmra.mxu0 %v186
    %v264 = vpop.f32.mrf.mxu0
    %v265 = vadd.f32 %v205, %v264
    %v266 = vpop.f32.mrf.mxu0
    %267 = vdwg.mxu0
    %v268 = vmax.f32 %v265, 0.0
    %v269 = vpack.c.bf16 %v268, %v268
    %s270 = scalar_lea.vmem [#allocation7], 64
    %v271 = vld [vmem:[%s270] sm:$0xf]
    %v272 = vld [vmem:[%s270 + $0x4] sm:$0xf]
    %v273 = vld [vmem:[%s270 + $0x8] sm:$0xf]
    %v274 = vld [vmem:[%s270 + $0xc] sm:$0xf]
    %v275 = vld [vmem:[%s270 + $0x10] sm:$0xf]
    %v276 = vld [vmem:[%s270 + $0x14] sm:$0xf]
    %v277 = vld [vmem:[%s270 + $0x18] sm:$0xf]
    %v278 = vld [vmem:[%s270 + $0x1c] sm:$0xf]
    %v279 = vld [vmem:[%s270 + $0x20] sm:$0xf]
    %v280 = vld [vmem:[%s270 + $0x24] sm:$0xf]
    %v281 = vld [vmem:[%s270 + $0x28] sm:$0xf]
    %v282 = vld [vmem:[%s270 + $0x2c] sm:$0xf]
    %v283 = vld [vmem:[%s270 + $0x30] sm:$0xf]
    %v284 = vld [vmem:[%s270 + $0x34] sm:$0xf]
    %v285 = vld [vmem:[%s270 + $0x38] sm:$0xf]
    %v286 = vld [vmem:[%s270 + $0x3c] sm:$0xf]
    %s287 = scalar_lea.vmem [#allocation8], 1
    %v288 = vld [vmem:[%s287] sm:$0x1]
    %v290 = vperm.slane %v288, 0
    %v308 = vunpack.c.l.b16 %v271
    %v309 = vunpack.c.l.b16 %v272
    %v310 = vunpack.c.l.b16 %v273
    %v311 = vunpack.c.l.b16 %v274
    %v312 = vunpack.c.l.b16 %v275
    %v313 = vunpack.c.l.b16 %v276
    %v314 = vunpack.c.l.b16 %v277
    %v315 = vunpack.c.l.b16 %v278
    %v316 = vunpack.c.l.b16 %v279
    %v317 = vunpack.c.l.b16 %v280
    %v318 = vunpack.c.l.b16 %v281
    %v319 = vunpack.c.l.b16 %v282
    %v320 = vunpack.c.l.b16 %v283
    %v321 = vunpack.c.l.b16 %v284
    %v322 = vunpack.c.l.b16 %v285
    %v323 = vunpack.c.l.b16 %v286
    %v324 = vpack.c.b16 %v309, %v308
    %v325 = vpack.c.b16 %v311, %v310
    %v326 = vpack.c.b16 %v313, %v312
    %v327 = vpack.c.b16 %v315, %v314
    %v328 = vpack.c.b16 %v317, %v316
    %v329 = vpack.c.b16 %v319, %v318
    %v330 = vpack.c.b16 %v321, %v320
    %v331 = vpack.c.b16 %v323, %v322
    %340 = vmatpush.bf16.msra.mxu0 %v331
    %341 = vmatpush.bf16.msra.mxu0 %v330
    %342 = vmatpush.bf16.msra.mxu0 %v329
    %343 = vmatpush.bf16.msra.mxu0 %v328
    %344 = vmatpush.bf16.msra.mxu0 %v327
    %345 = vmatpush.bf16.msra.mxu0 %v326
    %346 = vmatpush.bf16.msra.mxu0 %v325
    %347 = vmatpush.bf16.msra.mxu0 %v324
    %348 = vmatmul.bf16.gmra.mxu0 %v269
    %v349 = vpop.f32.mrf.mxu0
    %v350 = vadd.f32 %v290, %v349
    %v351 = vpop.f32.mrf.mxu0
    %352 = vdwg.mxu0
    %v353 = vmax.f32 %v350, 0.0
    %v354 = vpack.c.bf16 %v353, %v353
    %s355 = scalar_lea.vmem [#allocation7], 128
    %v356 = vld [vmem:[%s355] sm:$0xf]
    %v357 = vld [vmem:[%s355 + $0x4] sm:$0xf]
    %v358 = vld [vmem:[%s355 + $0x8] sm:$0xf]
    %v359 = vld [vmem:[%s355 + $0xc] sm:$0xf]
    %v360 = vld [vmem:[%s355 + $0x10] sm:$0xf]
    %v361 = vld [vmem:[%s355 + $0x14] sm:$0xf]
    %v362 = vld [vmem:[%s355 + $0x18] sm:$0xf]
    %v363 = vld [vmem:[%s355 + $0x1c] sm:$0xf]
    %v364 = vld [vmem:[%s355 + $0x20] sm:$0xf]
    %v365 = vld [vmem:[%s355 + $0x24] sm:$0xf]
    %v366 = vld [vmem:[%s355 + $0x28] sm:$0xf]
    %v367 = vld [vmem:[%s355 + $0x2c] sm:$0xf]
    %v368 = vld [vmem:[%s355 + $0x30] sm:$0xf]
    %v369 = vld [vmem:[%s355 + $0x34] sm:$0xf]
    %v370 = vld [vmem:[%s355 + $0x38] sm:$0xf]
    %v371 = vld [vmem:[%s355 + $0x3c] sm:$0xf]
    %s372 = scalar_lea.vmem [#allocation8], 2
    %v373 = vld [vmem:[%s372] sm:$0x1]
    %v375 = vperm.slane %v373, 0
    %v393 = vunpack.c.l.b16 %v356
    %v394 = vunpack.c.l.b16 %v357
    %v395 = vunpack.c.l.b16 %v358
    %v396 = vunpack.c.l.b16 %v359
    %v397 = vunpack.c.l.b16 %v360
    %v398 = vunpack.c.l.b16 %v361
    %v399 = vunpack.c.l.b16 %v362
    %v400 = vunpack.c.l.b16 %v363
    %v401 = vunpack.c.l.b16 %v364
    %v402 = vunpack.c.l.b16 %v365
    %v403 = vunpack.c.l.b16 %v366
    %v404 = vunpack.c.l.b16 %v367
    %v405 = vunpack.c.l.b16 %v368
    %v406 = vunpack.c.l.b16 %v369
    %v407 = vunpack.c.l.b16 %v370
    %v408 = vunpack.c.l.b16 %v371
    %v409 = vpack.c.b16 %v394, %v393
    %v410 = vpack.c.b16 %v396, %v395
    %v411 = vpack.c.b16 %v398, %v397
    %v412 = vpack.c.b16 %v400, %v399
    %v413 = vpack.c.b16 %v402, %v401
    %v414 = vpack.c.b16 %v404, %v403
    %v415 = vpack.c.b16 %v406, %v405
    %v416 = vpack.c.b16 %v408, %v407
    %425 = vmatpush.bf16.msra.mxu0 %v416
    %426 = vmatpush.bf16.msra.mxu0 %v415
    %427 = vmatpush.bf16.msra.mxu0 %v414
    %428 = vmatpush.bf16.msra.mxu0 %v413
    %429 = vmatpush.bf16.msra.mxu0 %v412
    %430 = vmatpush.bf16.msra.mxu0 %v411
    %431 = vmatpush.bf16.msra.mxu0 %v410
    %432 = vmatpush.bf16.msra.mxu0 %v409
    %433 = vmatmul.bf16.gmra.mxu0 %v354
    %v434 = vpop.f32.mrf.mxu0
    %v435 = vadd.f32 %v375, %v434
    %v436 = vpop.f32.mrf.mxu0
    %437 = vdwg.mxu0
    %v438 = vmax.f32 %v435, 0.0
    %v439 = vpack.c.bf16 %v438, %v438
    %s440 = scalar_lea.vmem [#allocation7], 192
    %v441 = vld [vmem:[%s440] sm:$0xf]
    %v442 = vld [vmem:[%s440 + $0x4] sm:$0xf]
    %v443 = vld [vmem:[%s440 + $0x8] sm:$0xf]
    %v444 = vld [vmem:[%s440 + $0xc] sm:$0xf]
    %v445 = vld [vmem:[%s440 + $0x10] sm:$0xf]
    %v446 = vld [vmem:[%s440 + $0x14] sm:$0xf]
    %v447 = vld [vmem:[%s440 + $0x18] sm:$0xf]
    %v448 = vld [vmem:[%s440 + $0x1c] sm:$0xf]
    %v449 = vld [vmem:[%s440 + $0x20] sm:$0xf]
    %v450 = vld [vmem:[%s440 + $0x24] sm:$0xf]
    %v451 = vld [vmem:[%s440 + $0x28] sm:$0xf]
    %v452 = vld [vmem:[%s440 + $0x2c] sm:$0xf]
    %v453 = vld [vmem:[%s440 + $0x30] sm:$0xf]
    %v454 = vld [vmem:[%s440 + $0x34] sm:$0xf]
    %v455 = vld [vmem:[%s440 + $0x38] sm:$0xf]
    %v456 = vld [vmem:[%s440 + $0x3c] sm:$0xf]
    %s457 = scalar_lea.vmem [#allocation8], 3
    %v458 = vld [vmem:[%s457] sm:$0x1]
    %v460 = vperm.slane %v458, 0
    %v478 = vunpack.c.l.b16 %v441
    %v479 = vunpack.c.l.b16 %v442
    %v480 = vunpack.c.l.b16 %v443
    %v481 = vunpack.c.l.b16 %v444
    %v482 = vunpack.c.l.b16 %v445
    %v483 = vunpack.c.l.b16 %v446
    %v484 = vunpack.c.l.b16 %v447
    %v485 = vunpack.c.l.b16 %v448
    %v486 = vunpack.c.l.b16 %v449
    %v487 = vunpack.c.l.b16 %v450
    %v488 = vunpack.c.l.b16 %v451
    %v489 = vunpack.c.l.b16 %v452
    %v490 = vunpack.c.l.b16 %v453
    %v491 = vunpack.c.l.b16 %v454
    %v492 = vunpack.c.l.b16 %v455
    %v493 = vunpack.c.l.b16 %v456
    %v494 = vpack.c.b16 %v479, %v478
    %v495 = vpack.c.b16 %v481, %v480
    %v496 = vpack.c.b16 %v483, %v482
    %v497 = vpack.c.b16 %v485, %v484
    %v498 = vpack.c.b16 %v487, %v486
    %v499 = vpack.c.b16 %v489, %v488
    %v500 = vpack.c.b16 %v491, %v490
    %v501 = vpack.c.b16 %v493, %v492
    %510 = vmatpush.bf16.msra.mxu0 %v501
    %511 = vmatpush.bf16.msra.mxu0 %v500
    %512 = vmatpush.bf16.msra.mxu0 %v499
    %513 = vmatpush.bf16.msra.mxu0 %v498
    %514 = vmatpush.bf16.msra.mxu0 %v497
    %515 = vmatpush.bf16.msra.mxu0 %v496
    %516 = vmatpush.bf16.msra.mxu0 %v495
    %517 = vmatpush.bf16.msra.mxu0 %v494
    %518 = vmatmul.bf16.gmra.mxu0 %v439
    %v519 = vpop.f32.mrf.mxu0
    %v520 = vadd.f32 %v460, %v519
    %v521 = vpop.f32.mrf.mxu0
    %522 = vdwg.mxu0
    %v523 = vmax.f32 %v520, 0.0
    %v524 = vpack.c.bf16 %v523, %v523
    %v525 = vld [vmem:[#allocation10] sm:$0xf]
    %v526 = vld [vmem:[#allocation10 + $0x4] sm:$0xf]
    %v527 = vld [vmem:[#allocation10 + $0x8] sm:$0xf]
    %v528 = vld [vmem:[#allocation10 + $0xc] sm:$0xf]
    %v529 = vld [vmem:[#allocation10 + $0x10] sm:$0xf]
    %v530 = vld [vmem:[#allocation10 + $0x14] sm:$0xf]
    %v531 = vld [vmem:[#allocation10 + $0x18] sm:$0xf]
    %v532 = vld [vmem:[#allocation10 + $0x1c] sm:$0xf]
    %v533 = vld [vmem:[#allocation10 + $0x20] sm:$0xf]
    %v534 = vld [vmem:[#allocation10 + $0x24] sm:$0xf]
    %v535 = vld [vmem:[#allocation10 + $0x28] sm:$0xf]
    %v536 = vld [vmem:[#allocation10 + $0x2c] sm:$0xf]
    %v537 = vld [vmem:[#allocation10 + $0x30] sm:$0xf]
    %v538 = vld [vmem:[#allocation10 + $0x34] sm:$0xf]
    %v539 = vld [vmem:[#allocation10 + $0x38] sm:$0xf]
    %v540 = vld [vmem:[#allocation10 + $0x3c] sm:$0xf]
    %v541 = vld [vmem:[%s6] sm:$0x1]
    %v543 = vperm.slane %v541, 0
    %v561 = vunpack.c.l.b16 %v525
    %v562 = vunpack.c.l.b16 %v526
    %v563 = vunpack.c.l.b16 %v527
    %v564 = vunpack.c.l.b16 %v528
    %v565 = vunpack.c.l.b16 %v529
    %v566 = vunpack.c.l.b16 %v530
    %v567 = vunpack.c.l.b16 %v531
    %v568 = vunpack.c.l.b16 %v532
    %v569 = vunpack.c.l.b16 %v533
    %v570 = vunpack.c.l.b16 %v534
    %v571 = vunpack.c.l.b16 %v535
    %v572 = vunpack.c.l.b16 %v536
    %v573 = vunpack.c.l.b16 %v537
    %v574 = vunpack.c.l.b16 %v538
    %v575 = vunpack.c.l.b16 %v539
    %v576 = vunpack.c.l.b16 %v540
    %v577 = vpack.c.b16 %v562, %v561
    %v578 = vpack.c.b16 %v564, %v563
    %v579 = vpack.c.b16 %v566, %v565
    %v580 = vpack.c.b16 %v568, %v567
    %v581 = vpack.c.b16 %v570, %v569
    %v582 = vpack.c.b16 %v572, %v571
    %v583 = vpack.c.b16 %v574, %v573
    %v584 = vpack.c.b16 %v576, %v575
    %593 = vmatpush.bf16.msra.mxu0 %v584
    %594 = vmatpush.bf16.msra.mxu0 %v583
    %595 = vmatpush.bf16.msra.mxu0 %v582
    %596 = vmatpush.bf16.msra.mxu0 %v581
    %597 = vmatpush.bf16.msra.mxu0 %v580
    %598 = vmatpush.bf16.msra.mxu0 %v579
    %599 = vmatpush.bf16.msra.mxu0 %v578
    %600 = vmatpush.bf16.msra.mxu0 %v577
    %601 = vmatmul.bf16.gmra.mxu0 %v524
    %v602 = vpop.f32.mrf.mxu0
    %v603 = vadd.f32 %v543, %v602
    %v604 = vpop.f32.mrf.mxu0
    %605 = vdwg.mxu0
    %606 = vst [vmem:[#allocation11] sm:$0xff] %v603
    // Predicated region
    $region50: #{tpu_custom_call.1} parent=1 // pred_check
      _
    $region51: #{tpu_custom_call.1} parent=1 // pred_check_branch
      %608 = sbr.rel (0) target = $region53
    $region52: #{tpu_custom_call.1} parent=1 // pred_region
      %610 = vsyncadd [#allocation4], 0
      %s612 = sshll.u32 [#allocation11], 4
      %s613 = int_to_ptr.vmem [resolvable:$true] %s612
      %s614 = sshll.u32 %s7, 4
      %s615 = int_to_ptr.hbm [resolvable:$true] %s614
      %617 = dma.vmem_to_hbm [thread:$0]  %s613, 128, %s615, [#allocation4]
    $region53: #{tpu_custom_call.1} parent=1 // pred_fallthru
      _
    // Predicated region
    $region54: #{tpu_custom_call.1} parent=1 // pred_check
      _
    $region55: #{tpu_custom_call.1} parent=1 // pred_check_branch
      %619 = sbr.rel (0) target = $region57
    $region56: #{tpu_custom_call.1} parent=1 // pred_region
      %621 = dma.done [#allocation4], 128
    $region57: #{tpu_custom_call.1} parent=1 // pred_fallthru
      _
    %622 = vsyncpa [#allocation3], 1
    %623 = vsyncpa [#allocation6], 1
    %624 = vsyncpa [#allocation9], 1
    %625 = vsyncpa [#allocation4], 1

</llo_original>
